<compile_context>
chip_gen: v7x
topology: tpu7x:2x2x1
jax: 0.10.0
libtpu: 0.0.40
codegen_flags: <defaults>
</compile_context>

<pallas_src>
import functools

import jax
import jax.numpy as jnp
from jax.experimental import pallas as pl
from jax.experimental.pallas import tpu as pltpu

_LANE = 128     # vreg lane width (last dim)
_SUBLANE = 8    # vreg sublane width (second-to-last dim)


def _round_up(x, m):
    return ((x + m - 1) // m) * m


def _cdiv(a, b):
    return -(-a // b)


def generator_mlp_kernel(z_ref,
                         w1_ref, b1_ref,
                         w2_ref, b2_ref,
                         w3_ref, b3_ref,
                         w4_ref, b4_ref,
                         out_ref):
    """Whole 4-layer MLP for one batch tile; all operands resident in VMEM."""
    x = z_ref[...]

    # Layer 1: Linear + ReLU
    h = jnp.dot(x, w1_ref[...], preferred_element_type=jnp.float32) + b1_ref[...]
    h = jnp.maximum(h, 0.0)

    # Layer 2: Linear + ReLU
    h = jnp.dot(h, w2_ref[...], preferred_element_type=jnp.float32) + b2_ref[...]
    h = jnp.maximum(h, 0.0)

    # Layer 3: Linear + ReLU
    h = jnp.dot(h, w3_ref[...], preferred_element_type=jnp.float32) + b3_ref[...]
    h = jnp.maximum(h, 0.0)

    # Layer 4: Linear (no activation)
    y = jnp.dot(h, w4_ref[...], preferred_element_type=jnp.float32) + b4_ref[...]

    out_ref[...] = y.astype(out_ref.dtype)


def _pad2(a, rows, cols):
    """Zero-pad a 2-D array up to (rows, cols)."""
    r, c = a.shape
    return jnp.pad(a.astype(jnp.float32), ((0, rows - r), (0, cols - c)))


@functools.partial(jax.jit, static_argnames=("block_b",))
def generator_forward_pallas(z, params, block_b=512):
    """params: dict of transposed weights wN (in, out) and biases bN (1, out)."""
    B, z_dim = z.shape
    hidden_dim = params["w1"].shape[1]
    data_dim = params["w4"].shape[1]

    # Lane-dense padded feature dims (multiple of 128).
    zp = _round_up(z_dim, _LANE)
    hp = _round_up(hidden_dim, _LANE)
    dp = _round_up(data_dim, _LANE)

    # --- batch tile selection ------------------------------------------------
    bb = min(block_b, _round_up(B, _SUBLANE))
    # Keep >= 2 grid steps when the batch allows it: dimension_semantics
    # ("parallel",) can then shard batch tiles across the 2 TCs on v7x.
    if B > _SUBLANE and _cdiv(B, bb) < 2:
        bb = _round_up(_cdiv(B, 2), _SUBLANE)
    Bp = _round_up(B, bb)
    grid = (Bp // bb,)

    # --- pad operands (zeros propagate cleanly through matmul/bias/ReLU) -----
    z_p = jnp.pad(z.astype(jnp.float32), ((0, Bp - B), (0, zp - z_dim)))
    w1 = _pad2(params["w1"], zp, hp); b1 = _pad2(params["b1"], 1, hp)
    w2 = _pad2(params["w2"], hp, hp); b2 = _pad2(params["b2"], 1, hp)
    w3 = _pad2(params["w3"], hp, hp); b3 = _pad2(params["b3"], 1, hp)
    w4 = _pad2(params["w4"], hp, dp); b4 = _pad2(params["b4"], 1, dp)

    # Weights/biases: full-array blocks with a constant index_map -> resident
    # in VMEM across all batch tiles.
    full = lambda arr: pl.BlockSpec(arr.shape, lambda i: (0,) * arr.ndim)

    # Explicit VMEM budget: double-buffered input/output tiles, resident
    # (double-buffered) params, plus slack for in-kernel intermediates.
    # Capped at 48 MiB so the same config fits v7x's 64 MiB VMEM with headroom.
    vmem_needed = 4 * (
        2 * bb * zp                      # pipelined input tile
        + 2 * bb * dp                    # pipelined output tile
        + 6 * bb * hp                    # in-kernel activation intermediates
        + 2 * (zp * hp + 2 * hp * hp + hp * dp + 3 * hp + dp)  # params
    )
    vmem_limit = int(min(48 * 1024 * 1024, max(16 * 1024 * 1024, vmem_needed)))

    out_p = pl.pallas_call(
        generator_mlp_kernel,
        out_shape=jax.ShapeDtypeStruct((Bp, dp), jnp.float32),
        grid_spec=pltpu.PrefetchScalarGridSpec(
            num_scalar_prefetch=0,
            grid=grid,
            in_specs=[
                pl.BlockSpec((bb, zp), lambda i: (i, 0)),
                full(w1), full(b1),
                full(w2), full(b2),
                full(w3), full(b3),
                full(w4), full(b4),
            ],
            out_specs=pl.BlockSpec((bb, dp), lambda i: (i, 0)),
        ),
        compiler_params=pltpu.CompilerParams(
            dimension_semantics=("parallel",),
            vmem_limit_bytes=vmem_limit,
        ),
    )(z_p, w1, b1, w2, b2, w3, b3, w4, b4)

    # Slice away batch/feature padding.
    return out_p[:B, :data_dim]


def generator_forward_ref(z, params):
    """Pure-JAX reference (also the small-problem fallback path)."""
    h = jnp.maximum(z @ params["w1"] + params["b1"], 0.0)
    h = jnp.maximum(h @ params["w2"] + params["b2"], 0.0)
    h = jnp.maximum(h @ params["w3"] + params["b3"], 0.0)
    return h @ params["w4"] + params["b4"]


def generator_forward(z, params, block_b=512):
    """Dispatch: tiny problems go straight to XLA (a Pallas launch + DMA
    prologue exceeds the useful work there); larger batches use the kernel."""
    B = z.shape[0]
    hidden_dim = params["w1"].shape[1]
    if B * hidden_dim < 128 * 32:
        return generator_forward_ref(z, params)
    return generator_forward_pallas(z, params, block_b=block_b)


def init_generator_params(key, data_dim, hidden_dim, z_dim):
    """Mirrors weights_init: Kaiming-normal weights (std = sqrt(2 / fan_in)),
    zero biases. Weights stored transposed (in, out)."""
    ks = jax.random.split(key, 4)

    def kaiming(k, fan_in, fan_out):
        std = (2.0 / fan_in) ** 0.5
        # PyTorch weight is (out, in); we store its transpose (in, out).
        return jax.random.normal(k, (fan_in, fan_out), dtype=jnp.float32) * std

    return {
        "w1": kaiming(ks[0], z_dim, hidden_dim),
        "b1": jnp.zeros((1, hidden_dim), jnp.float32),
        "w2": kaiming(ks[1], hidden_dim, hidden_dim),
        "b2": jnp.zeros((1, hidden_dim), jnp.float32),
        "w3": kaiming(ks[2], hidden_dim, hidden_dim),
        "b3": jnp.zeros((1, hidden_dim), jnp.float32),
        "w4": kaiming(ks[3], hidden_dim, data_dim),
        "b4": jnp.zeros((1, data_dim), jnp.float32),
    }


if __name__ == "__main__":
    # Small-but-not-trivial shapes consistent with the module:
    # z_dim=16, hidden=32, data_dim=16; batch=256 so the Pallas path is
    # exercised with a >=2-step parallel grid.
    batch, z_dim, hidden_dim, data_dim = 256, 16, 32, 16

    key = jax.random.PRNGKey(0)
    k_param, k_z = jax.random.split(key)

    params = init_generator_params(k_param, data_dim, hidden_dim, z_dim)
    z = jax.random.normal(k_z, (batch, z_dim), dtype=jnp.float32)

    out = generator_forward_pallas(z, params)   # run the Pallas kernel
    out = jax.block_until_ready(out)

    ref = generator_forward_ref(z, params)
    assert out.shape == (batch, data_dim)
    assert jnp.allclose(out, ref, atol=1e-4, rtol=1e-4), "mismatch vs reference"

    print("KERNEL_OK")
</pallas_src>

<mosaic_0001>
module attributes {stable_mosaic.version = 11 : i64} {
  func.func @generator_mlp_kernel(%arg0: i32, %arg1: memref<128x128xf32, #tpu.memory_space<vmem>>, %arg2: memref<128x128xf32, #tpu.memory_space<vmem>>, %arg3: memref<1x128xf32, #tpu.memory_space<vmem>>, %arg4: memref<128x128xf32, #tpu.memory_space<vmem>>, %arg5: memref<1x128xf32, #tpu.memory_space<vmem>>, %arg6: memref<128x128xf32, #tpu.memory_space<vmem>>, %arg7: memref<1x128xf32, #tpu.memory_space<vmem>>, %arg8: memref<128x128xf32, #tpu.memory_space<vmem>>, %arg9: memref<1x128xf32, #tpu.memory_space<vmem>>, %arg10: memref<128x128xf32, #tpu.memory_space<vmem>>) attributes {dimension_semantics = [#tpu.dimension_semantics<parallel>], iteration_bounds = array<i64: 2>, scalar_prefetch = 0 : i64, scratch_operands = 0 : i64, tpu.core_type = #tpu.core_type<tc>, window_params = [{transform_indices = @transform_0, window_bounds = array<i64: 128, 128>}, {pipeline_mode = #tpu.pipeline_mode<synchronous>, transform_indices = @transform_1, window_bounds = array<i64: 128, 128>}, {pipeline_mode = #tpu.pipeline_mode<synchronous>, transform_indices = @transform_2, window_bounds = array<i64: 1, 128>}, {pipeline_mode = #tpu.pipeline_mode<synchronous>, transform_indices = @transform_3, window_bounds = array<i64: 128, 128>}, {pipeline_mode = #tpu.pipeline_mode<synchronous>, transform_indices = @transform_4, window_bounds = array<i64: 1, 128>}, {pipeline_mode = #tpu.pipeline_mode<synchronous>, transform_indices = @transform_5, window_bounds = array<i64: 128, 128>}, {pipeline_mode = #tpu.pipeline_mode<synchronous>, transform_indices = @transform_6, window_bounds = array<i64: 1, 128>}, {pipeline_mode = #tpu.pipeline_mode<synchronous>, transform_indices = @transform_7, window_bounds = array<i64: 128, 128>}, {pipeline_mode = #tpu.pipeline_mode<synchronous>, transform_indices = @transform_8, window_bounds = array<i64: 1, 128>}, {transform_indices = @transform_9, window_bounds = array<i64: 128, 128>}]} {
    %c0 = arith.constant 0 : index
    %c0_0 = arith.constant 0 : index
    %0 = vector.load %arg1[%c0, %c0_0] : memref<128x128xf32, #tpu.memory_space<vmem>>, vector<128x128xf32>
    %c0_1 = arith.constant 0 : index
    %c0_2 = arith.constant 0 : index
    %1 = vector.load %arg2[%c0_1, %c0_2] : memref<128x128xf32, #tpu.memory_space<vmem>>, vector<128x128xf32>
    %cst = arith.constant dense<0.000000e+00> : vector<128x128xf32>
    %2 = tpu.matmul %0, %1, %cst {dimension_numbers = #tpu.dot_dimension_numbers<[1], [0], [0], [1], [0, 0, 1, 1], [], []>} : vector<128x128xf32>, vector<128x128xf32>, vector<128x128xf32> -> vector<128x128xf32>
    %c0_3 = arith.constant 0 : index
    %c0_4 = arith.constant 0 : index
    %3 = vector.load %arg3[%c0_3, %c0_4] : memref<1x128xf32, #tpu.memory_space<vmem>>, vector<1x128xf32>
    %4 = vector.broadcast %3 : vector<1x128xf32> to vector<128x128xf32>
    %5 = arith.addf %2, %4 : vector<128x128xf32>
    %cst_5 = arith.constant 0.000000e+00 : f32
    %6 = vector.broadcast %cst_5 : f32 to vector<128x128xf32>
    %7 = arith.maximumf %5, %6 : vector<128x128xf32>
    %c0_6 = arith.constant 0 : index
    %c0_7 = arith.constant 0 : index
    %8 = vector.load %arg4[%c0_6, %c0_7] : memref<128x128xf32, #tpu.memory_space<vmem>>, vector<128x128xf32>
    %cst_8 = arith.constant dense<0.000000e+00> : vector<128x128xf32>
    %9 = tpu.matmul %7, %8, %cst_8 {dimension_numbers = #tpu.dot_dimension_numbers<[1], [0], [0], [1], [0, 0, 1, 1], [], []>} : vector<128x128xf32>, vector<128x128xf32>, vector<128x128xf32> -> vector<128x128xf32>
    %c0_9 = arith.constant 0 : index
    %c0_10 = arith.constant 0 : index
    %10 = vector.load %arg5[%c0_9, %c0_10] : memref<1x128xf32, #tpu.memory_space<vmem>>, vector<1x128xf32>
    %11 = vector.broadcast %10 : vector<1x128xf32> to vector<128x128xf32>
    %12 = arith.addf %9, %11 : vector<128x128xf32>
    %cst_11 = arith.constant 0.000000e+00 : f32
    %13 = vector.broadcast %cst_11 : f32 to vector<128x128xf32>
    %14 = arith.maximumf %12, %13 : vector<128x128xf32>
    %c0_12 = arith.constant 0 : index
    %c0_13 = arith.constant 0 : index
    %15 = vector.load %arg6[%c0_12, %c0_13] : memref<128x128xf32, #tpu.memory_space<vmem>>, vector<128x128xf32>
    %cst_14 = arith.constant dense<0.000000e+00> : vector<128x128xf32>
    %16 = tpu.matmul %14, %15, %cst_14 {dimension_numbers = #tpu.dot_dimension_numbers<[1], [0], [0], [1], [0, 0, 1, 1], [], []>} : vector<128x128xf32>, vector<128x128xf32>, vector<128x128xf32> -> vector<128x128xf32>
    %c0_15 = arith.constant 0 : index
    %c0_16 = arith.constant 0 : index
    %17 = vector.load %arg7[%c0_15, %c0_16] : memref<1x128xf32, #tpu.memory_space<vmem>>, vector<1x128xf32>
    %18 = vector.broadcast %17 : vector<1x128xf32> to vector<128x128xf32>
    %19 = arith.addf %16, %18 : vector<128x128xf32>
    %cst_17 = arith.constant 0.000000e+00 : f32
    %20 = vector.broadcast %cst_17 : f32 to vector<128x128xf32>
    %21 = arith.maximumf %19, %20 : vector<128x128xf32>
    %c0_18 = arith.constant 0 : index
    %c0_19 = arith.constant 0 : index
    %22 = vector.load %arg8[%c0_18, %c0_19] : memref<128x128xf32, #tpu.memory_space<vmem>>, vector<128x128xf32>
    %cst_20 = arith.constant dense<0.000000e+00> : vector<128x128xf32>
    %23 = tpu.matmul %21, %22, %cst_20 {dimension_numbers = #tpu.dot_dimension_numbers<[1], [0], [0], [1], [0, 0, 1, 1], [], []>} : vector<128x128xf32>, vector<128x128xf32>, vector<128x128xf32> -> vector<128x128xf32>
    %c0_21 = arith.constant 0 : index
    %c0_22 = arith.constant 0 : index
    %24 = vector.load %arg9[%c0_21, %c0_22] : memref<1x128xf32, #tpu.memory_space<vmem>>, vector<1x128xf32>
    %25 = vector.broadcast %24 : vector<1x128xf32> to vector<128x128xf32>
    %26 = arith.addf %23, %25 : vector<128x128xf32>
    %c0_23 = arith.constant 0 : index
    %c0_24 = arith.constant 0 : index
    %27 = vector.load %arg10[%c0_23, %c0_24] : memref<128x128xf32, #tpu.memory_space<vmem>>, vector<128x128xf32>
    tpu.vector_store %arg10[%c0_23, %c0_24], %26 {strides = array<i32>} : memref<128x128xf32, #tpu.memory_space<vmem>>, vector<128x128xf32>,
    return
  }
  func.func @transform_0(%arg0: i32) -> (i32, i32) {
    %c0_i32 = arith.constant 0 : i32
    %c0_i32_0 = arith.constant 0 : i32
    return %arg0, %c0_i32 : i32, i32
  }
  func.func @transform_1(%arg0: i32) -> (i32, i32) {
    %c0_i32 = arith.constant 0 : i32
    %c0_i32_0 = arith.constant 0 : i32
    %c0_i32_1 = arith.constant 0 : i32
    return %c0_i32, %c0_i32_0 : i32, i32
  }
  func.func @transform_2(%arg0: i32) -> (i32, i32) {
    %c0_i32 = arith.constant 0 : i32
    %c0_i32_0 = arith.constant 0 : i32
    %c0_i32_1 = arith.constant 0 : i32
    return %c0_i32, %c0_i32_0 : i32, i32
  }
  func.func @transform_3(%arg0: i32) -> (i32, i32) {
    %c0_i32 = arith.constant 0 : i32
    %c0_i32_0 = arith.constant 0 : i32
    %c0_i32_1 = arith.constant 0 : i32
    return %c0_i32, %c0_i32_0 : i32, i32
  }
  func.func @transform_4(%arg0: i32) -> (i32, i32) {
    %c0_i32 = arith.constant 0 : i32
    %c0_i32_0 = arith.constant 0 : i32
    %c0_i32_1 = arith.constant 0 : i32
    return %c0_i32, %c0_i32_0 : i32, i32
  }
  func.func @transform_5(%arg0: i32) -> (i32, i32) {
    %c0_i32 = arith.constant 0 : i32
    %c0_i32_0 = arith.constant 0 : i32
    %c0_i32_1 = arith.constant 0 : i32
    return %c0_i32, %c0_i32_0 : i32, i32
  }
  func.func @transform_6(%arg0: i32) -> (i32, i32) {
    %c0_i32 = arith.constant 0 : i32
    %c0_i32_0 = arith.constant 0 : i32
    %c0_i32_1 = arith.constant 0 : i32
    return %c0_i32, %c0_i32_0 : i32, i32
  }
  func.func @transform_7(%arg0: i32) -> (i32, i32) {
    %c0_i32 = arith.constant 0 : i32
    %c0_i32_0 = arith.constant 0 : i32
    %c0_i32_1 = arith.constant 0 : i32
    return %c0_i32, %c0_i32_0 : i32, i32
  }
  func.func @transform_8(%arg0: i32) -> (i32, i32) {
    %c0_i32 = arith.constant 0 : i32
    %c0_i32_0 = arith.constant 0 : i32
    %c0_i32_1 = arith.constant 0 : i32
    return %c0_i32, %c0_i32_0 : i32, i32
  }
  func.func @transform_9(%arg0: i32) -> (i32, i32) {
    %c0_i32 = arith.constant 0 : i32
    %c0_i32_0 = arith.constant 0 : i32
    return %arg0, %c0_i32 : i32, i32
  }
}

</mosaic_0001>

<llo_original>
// kernel: generator_forward_pallas.1
$region0: #{generator_forward_pallas.1}
  #allocation0 [shape = 'u32[]', space=smem, size = 0x4, offset = 0x4, fixed_abs, tag = 'smem constant byte address 0x4 - core index']
  #allocation1 [shape = 'u32[144,128]{1,0:T(1,128)}', space=vmem, size = 0x12000, scoped, tag = 'internal scratch']
  %s0 = inlined_call_operand.vmem [shape: f32[256,128], index: 0, kind: input, shape index: {}]
  %s1 = inlined_call_operand.vmem [shape: f32[128,128], index: 1, kind: input, shape index: {}]
  %s2 = inlined_call_operand.vmem [shape: f32[1,128], index: 2, kind: input, shape index: {}]
  %s3 = inlined_call_operand.vmem [shape: f32[128,128], index: 3, kind: input, shape index: {}]
  %s4 = inlined_call_operand.vmem [shape: f32[1,128], index: 4, kind: input, shape index: {}]
  %s5 = inlined_call_operand.vmem [shape: f32[128,128], index: 5, kind: input, shape index: {}]
  %s6 = inlined_call_operand.vmem [shape: f32[1,128], index: 6, kind: input, shape index: {}]
  %s7 = inlined_call_operand.vmem [shape: f32[128,128], index: 7, kind: input, shape index: {}]
  %s8 = inlined_call_operand.vmem [shape: f32[1,128], index: 8, kind: input, shape index: {}]
  %s9 = inlined_call_operand.vmem [shape: f32[256,128], index: 9, kind: output, shape index: {}]
  %s10 = sld [smem:[#allocation0]]
  $region69: #{generator_forward_pallas.1} parent=0
    _
  %s12 = ssub.s32 1, %s10
  %s13 = scalar_select 0, %s12, %s10
  loop: start=0, step=1, limit=4
  $region2: #{generator_forward_pallas.1} parent=0 // loop_pre_header
    _
  $region3: #{generator_forward_pallas.1} parent=0 // loop_header
    %s15 = sphi 0, %s19
    %p16 = scmp.ge.s32.totalorder %s15, 4
    %s25 = sphi 0, %s27
    %s28 = sphi 0, %s25
    %s29 = sphi 0, %s28
    %s45 = sphi 0, %s29
    %s49 = sphi 0, %s49
    %s51 = sphi 0, %s49
    %s52 = sphi 0, %s51
    %s66 = sphi 0, %s52
    %s70 = sphi 0, %s70
    %s72 = sphi 0, %s70
    %s73 = sphi 0, %s72
    %s87 = sphi 0, %s73
    %s91 = sphi 0, %s91
    %s93 = sphi 0, %s91
    %s94 = sphi 0, %s93
    %s108 = sphi 0, %s94
    %s112 = sphi 0, %s112
    %s114 = sphi 0, %s112
    %s115 = sphi 0, %s114
    %s129 = sphi 0, %s115
    %s133 = sphi 0, %s133
    %s135 = sphi 0, %s133
    %s136 = sphi 0, %s135
    %s150 = sphi 0, %s136
    %s154 = sphi 0, %s154
    %s156 = sphi 0, %s154
    %s157 = sphi 0, %s156
    %s171 = sphi 0, %s157
    %s175 = sphi 0, %s175
    %s177 = sphi 0, %s175
    %s178 = sphi 0, %s177
    %s192 = sphi 0, %s178
    %s196 = sphi 0, %s196
    %s198 = sphi 0, %s196
    %s199 = sphi 0, %s198
    %s213 = sphi 0, %s199
    %s219 = sphi 0, %s221
    %s222 = sphi 0, %s219
    %s223 = sphi 0, %s222
    %s239 = sphi 0, %s223
  $region4: #{generator_forward_pallas.1} parent=0 // loop_header_branch
    %18 = sbr.rel (%p16) target = $region8
  $region5: #{generator_forward_pallas.1} parent=0 // loop_body
    %s20 = ssub.s32 %s15, 1
    %s21 = ssub.s32 %s15, 2
    %s22 = sadd.s32 %s15, 1
    %s23 = ssub.s32 %s15, %s22
    %p24 = scmp.eq.s32.totalorder %s23, 0
    %s26 = sadd.s32 %s25, 1
    %s27 = scalar_select %p24, %s25, %s26
    %p30 = pneg %p24
    %p31 = scmp.eq.s32.totalorder %s15, 1
    %p32 = por %p30, %p31
    %p33 = scmp.ne.s32.totalorder %s25, %s28
    %p34 = scmp.eq.s32.totalorder %s15, 0
    %p35 = por %p33, %p34
    %p36 = scmp.ne.s32.totalorder %s25, %s28
    %p37 = scmp.eq.s32.totalorder %s20, 1
    %p38 = por %p36, %p37
    %p39 = scmp.ne.s32.totalorder %s28, %s29
    %p40 = scmp.eq.s32.totalorder %s20, 0
    %p41 = por %p39, %p40
    %p42 = scmp.ne.s32.totalorder %s28, %s29
    %p43 = scmp.eq.s32.totalorder %s21, 1
    %p44 = por %p42, %p43
    %p46 = scmp.ne.s32.totalorder %s29, %s45
    %p47 = scmp.eq.s32.totalorder %s21, 0
    %p48 = por %p46, %p47
    %s50 = sadd.s32 %s49, 1
    %p53 = scmp.eq.s32.totalorder %s15, 1
    %p54 = scmp.ne.s32.totalorder %s49, %s51
    %p55 = scmp.eq.s32.totalorder %s15, 0
    %p56 = por %p54, %p55
    %p57 = scmp.ne.s32.totalorder %s49, %s51
    %p58 = scmp.eq.s32.totalorder %s20, 1
    %p59 = por %p57, %p58
    %p60 = scmp.ne.s32.totalorder %s51, %s52
    %p61 = scmp.eq.s32.totalorder %s20, 0
    %p62 = por %p60, %p61
    %p63 = scmp.ne.s32.totalorder %s51, %s52
    %p64 = scmp.eq.s32.totalorder %s21, 1
    %p65 = por %p63, %p64
    %p67 = scmp.ne.s32.totalorder %s52, %s66
    %p68 = scmp.eq.s32.totalorder %s21, 0
    %p69 = por %p67, %p68
    %s71 = sadd.s32 %s70, 1
    %p74 = scmp.eq.s32.totalorder %s15, 1
    %p75 = scmp.ne.s32.totalorder %s70, %s72
    %p76 = scmp.eq.s32.totalorder %s15, 0
    %p77 = por %p75, %p76
    %p78 = scmp.ne.s32.totalorder %s70, %s72
    %p79 = scmp.eq.s32.totalorder %s20, 1
    %p80 = por %p78, %p79
    %p81 = scmp.ne.s32.totalorder %s72, %s73
    %p82 = scmp.eq.s32.totalorder %s20, 0
    %p83 = por %p81, %p82
    %p84 = scmp.ne.s32.totalorder %s72, %s73
    %p85 = scmp.eq.s32.totalorder %s21, 1
    %p86 = por %p84, %p85
    %p88 = scmp.ne.s32.totalorder %s73, %s87
    %p89 = scmp.eq.s32.totalorder %s21, 0
    %p90 = por %p88, %p89
    %s92 = sadd.s32 %s91, 1
    %p95 = scmp.eq.s32.totalorder %s15, 1
    %p96 = scmp.ne.s32.totalorder %s91, %s93
    %p97 = scmp.eq.s32.totalorder %s15, 0
    %p98 = por %p96, %p97
    %p99 = scmp.ne.s32.totalorder %s91, %s93
    %p100 = scmp.eq.s32.totalorder %s20, 1
    %p101 = por %p99, %p100
    %p102 = scmp.ne.s32.totalorder %s93, %s94
    %p103 = scmp.eq.s32.totalorder %s20, 0
    %p104 = por %p102, %p103
    %p105 = scmp.ne.s32.totalorder %s93, %s94
    %p106 = scmp.eq.s32.totalorder %s21, 1
    %p107 = por %p105, %p106
    %p109 = scmp.ne.s32.totalorder %s94, %s108
    %p110 = scmp.eq.s32.totalorder %s21, 0
    %p111 = por %p109, %p110
    %s113 = sadd.s32 %s112, 1
    %p116 = scmp.eq.s32.totalorder %s15, 1
    %p117 = scmp.ne.s32.totalorder %s112, %s114
    %p118 = scmp.eq.s32.totalorder %s15, 0
    %p119 = por %p117, %p118
    %p120 = scmp.ne.s32.totalorder %s112, %s114
    %p121 = scmp.eq.s32.totalorder %s20, 1
    %p122 = por %p120, %p121
    %p123 = scmp.ne.s32.totalorder %s114, %s115
    %p124 = scmp.eq.s32.totalorder %s20, 0
    %p125 = por %p123, %p124
    %p126 = scmp.ne.s32.totalorder %s114, %s115
    %p127 = scmp.eq.s32.totalorder %s21, 1
    %p128 = por %p126, %p127
    %p130 = scmp.ne.s32.totalorder %s115, %s129
    %p131 = scmp.eq.s32.totalorder %s21, 0
    %p132 = por %p130, %p131
    %s134 = sadd.s32 %s133, 1
    %p137 = scmp.eq.s32.totalorder %s15, 1
    %p138 = scmp.ne.s32.totalorder %s133, %s135
    %p139 = scmp.eq.s32.totalorder %s15, 0
    %p140 = por %p138, %p139
    %p141 = scmp.ne.s32.totalorder %s133, %s135
    %p142 = scmp.eq.s32.totalorder %s20, 1
    %p143 = por %p141, %p142
    %p144 = scmp.ne.s32.totalorder %s135, %s136
    %p145 = scmp.eq.s32.totalorder %s20, 0
    %p146 = por %p144, %p145
    %p147 = scmp.ne.s32.totalorder %s135, %s136
    %p148 = scmp.eq.s32.totalorder %s21, 1
    %p149 = por %p147, %p148
    %p151 = scmp.ne.s32.totalorder %s136, %s150
    %p152 = scmp.eq.s32.totalorder %s21, 0
    %p153 = por %p151, %p152
    %s155 = sadd.s32 %s154, 1
    %p158 = scmp.eq.s32.totalorder %s15, 1
    %p159 = scmp.ne.s32.totalorder %s154, %s156
    %p160 = scmp.eq.s32.totalorder %s15, 0
    %p161 = por %p159, %p160
    %p162 = scmp.ne.s32.totalorder %s154, %s156
    %p163 = scmp.eq.s32.totalorder %s20, 1
    %p164 = por %p162, %p163
    %p165 = scmp.ne.s32.totalorder %s156, %s157
    %p166 = scmp.eq.s32.totalorder %s20, 0
    %p167 = por %p165, %p166
    %p168 = scmp.ne.s32.totalorder %s156, %s157
    %p169 = scmp.eq.s32.totalorder %s21, 1
    %p170 = por %p168, %p169
    %p172 = scmp.ne.s32.totalorder %s157, %s171
    %p173 = scmp.eq.s32.totalorder %s21, 0
    %p174 = por %p172, %p173
    %s176 = sadd.s32 %s175, 1
    %p179 = scmp.eq.s32.totalorder %s15, 1
    %p180 = scmp.ne.s32.totalorder %s175, %s177
    %p181 = scmp.eq.s32.totalorder %s15, 0
    %p182 = por %p180, %p181
    %p183 = scmp.ne.s32.totalorder %s175, %s177
    %p184 = scmp.eq.s32.totalorder %s20, 1
    %p185 = por %p183, %p184
    %p186 = scmp.ne.s32.totalorder %s177, %s178
    %p187 = scmp.eq.s32.totalorder %s20, 0
    %p188 = por %p186, %p187
    %p189 = scmp.ne.s32.totalorder %s177, %s178
    %p190 = scmp.eq.s32.totalorder %s21, 1
    %p191 = por %p189, %p190
    %p193 = scmp.ne.s32.totalorder %s178, %s192
    %p194 = scmp.eq.s32.totalorder %s21, 0
    %p195 = por %p193, %p194
    %s197 = sadd.s32 %s196, 1
    %p200 = scmp.eq.s32.totalorder %s15, 1
    %p201 = scmp.ne.s32.totalorder %s196, %s198
    %p202 = scmp.eq.s32.totalorder %s15, 0
    %p203 = por %p201, %p202
    %p204 = scmp.ne.s32.totalorder %s196, %s198
    %p205 = scmp.eq.s32.totalorder %s20, 1
    %p206 = por %p204, %p205
    %p207 = scmp.ne.s32.totalorder %s198, %s199
    %p208 = scmp.eq.s32.totalorder %s20, 0
    %p209 = por %p207, %p208
    %p210 = scmp.ne.s32.totalorder %s198, %s199
    %p211 = scmp.eq.s32.totalorder %s21, 1
    %p212 = por %p210, %p211
    %p214 = scmp.ne.s32.totalorder %s199, %s213
    %p215 = scmp.eq.s32.totalorder %s21, 0
    %p216 = por %p214, %p215
    %s217 = ssub.s32 %s15, %s22
    %p218 = scmp.eq.s32.totalorder %s217, 0
    %s220 = sadd.s32 %s219, 1
    %s221 = scalar_select %p218, %s219, %s220
    %p224 = pneg %p218
    %p225 = scmp.eq.s32.totalorder %s15, 1
    %p226 = por %p224, %p225
    %p227 = scmp.ne.s32.totalorder %s219, %s222
    %p228 = scmp.eq.s32.totalorder %s15, 0
    %p229 = por %p227, %p228
    %p230 = scmp.ne.s32.totalorder %s219, %s222
    %p231 = scmp.eq.s32.totalorder %s20, 1
    %p232 = por %p230, %p231
    %p233 = scmp.ne.s32.totalorder %s222, %s223
    %p234 = scmp.eq.s32.totalorder %s20, 0
    %p235 = por %p233, %p234
    %p236 = scmp.ne.s32.totalorder %s222, %s223
    %p237 = scmp.eq.s32.totalorder %s21, 1
    %p238 = por %p236, %p237
    %p240 = scmp.ne.s32.totalorder %s223, %s239
    %p241 = scmp.eq.s32.totalorder %s21, 0
    %p242 = por %p240, %p241
    %p243 = scmp.le.s32.totalorder 1, %s15
    %p244 = scmp.lt.s32.totalorder %s15, 3
    %p245 = pnand %p243, %p244
    %p246 = pneg %p245
    // Predicated region
    $region9: #{generator_forward_pallas.1} parent=5 // pred_check
      _
    $region10: #{generator_forward_pallas.1} parent=5 // pred_check_branch
      %248 = sbr.rel (%p245) target = $region12
    $region11: #{generator_forward_pallas.1} parent=5 // pred_region
      %s249 = ssub.s32 %s15, 1
      // Predicated region
      $region13: #{generator_forward_pallas.1} parent=11 // pred_check
        %p250 = pneg %p62
      $region14: #{generator_forward_pallas.1} parent=11 // pred_check_branch
        %252 = sbr.rel (%p250) target = $region16
      $region15: #{generator_forward_pallas.1} parent=11 // pred_region
        _
      $region16: #{generator_forward_pallas.1} parent=11 // pred_fallthru
        _
      // Predicated region
      $region17: #{generator_forward_pallas.1} parent=11 // pred_check
        %p253 = pneg %p83
      $region18: #{generator_forward_pallas.1} parent=11 // pred_check_branch
        %255 = sbr.rel (%p253) target = $region20
      $region19: #{generator_forward_pallas.1} parent=11 // pred_region
        _
      $region20: #{generator_forward_pallas.1} parent=11 // pred_fallthru
        _
      // Predicated region
      $region21: #{generator_forward_pallas.1} parent=11 // pred_check
        %p256 = pneg %p104
      $region22: #{generator_forward_pallas.1} parent=11 // pred_check_branch
        %258 = sbr.rel (%p256) target = $region24
      $region23: #{generator_forward_pallas.1} parent=11 // pred_region
        _
      $region24: #{generator_forward_pallas.1} parent=11 // pred_fallthru
        _
      // Predicated region
      $region25: #{generator_forward_pallas.1} parent=11 // pred_check
        %p259 = pneg %p125
      $region26: #{generator_forward_pallas.1} parent=11 // pred_check_branch
        %261 = sbr.rel (%p259) target = $region28
      $region27: #{generator_forward_pallas.1} parent=11 // pred_region
        _
      $region28: #{generator_forward_pallas.1} parent=11 // pred_fallthru
        _
      // Predicated region
      $region29: #{generator_forward_pallas.1} parent=11 // pred_check
        %p262 = pneg %p146
      $region30: #{generator_forward_pallas.1} parent=11 // pred_check_branch
        %264 = sbr.rel (%p262) target = $region32
      $region31: #{generator_forward_pallas.1} parent=11 // pred_region
        _
      $region32: #{generator_forward_pallas.1} parent=11 // pred_fallthru
        _
      // Predicated region
      $region33: #{generator_forward_pallas.1} parent=11 // pred_check
        %p265 = pneg %p167
      $region34: #{generator_forward_pallas.1} parent=11 // pred_check_branch
        %267 = sbr.rel (%p265) target = $region36
      $region35: #{generator_forward_pallas.1} parent=11 // pred_region
        _
      $region36: #{generator_forward_pallas.1} parent=11 // pred_fallthru
        _
      // Predicated region
      $region37: #{generator_forward_pallas.1} parent=11 // pred_check
        %p268 = pneg %p188
      $region38: #{generator_forward_pallas.1} parent=11 // pred_check_branch
        %270 = sbr.rel (%p268) target = $region40
      $region39: #{generator_forward_pallas.1} parent=11 // pred_region
        _
      $region40: #{generator_forward_pallas.1} parent=11 // pred_fallthru
        _
      // Predicated region
      $region41: #{generator_forward_pallas.1} parent=11 // pred_check
        %p271 = pneg %p209
      $region42: #{generator_forward_pallas.1} parent=11 // pred_check_branch
        %273 = sbr.rel (%p271) target = $region44
      $region43: #{generator_forward_pallas.1} parent=11 // pred_region
        _
      $region44: #{generator_forward_pallas.1} parent=11 // pred_fallthru
        _
    $region12: #{generator_forward_pallas.1} parent=5 // pred_fallthru
      _
    %p274 = scmp.lt.s32.totalorder %s15, 2
    // Predicated region
    $region45: #{generator_forward_pallas.1} parent=5 // pred_check
      %p275 = pneg %p274
    $region46: #{generator_forward_pallas.1} parent=5 // pred_check_branch
      %277 = sbr.rel (%p275) target = $region48
    $region47: #{generator_forward_pallas.1} parent=5 // pred_region
      // Predicated region
      $region49: #{generator_forward_pallas.1} parent=47 // pred_check
        %p278 = pneg %p35
      $region50: #{generator_forward_pallas.1} parent=47 // pred_check_branch
        %280 = sbr.rel (%p278) target = $region52
      $region51: #{generator_forward_pallas.1} parent=47 // pred_region
        %s281 = smul.u32 16, %s15
        %p282 = scmp.lt.s32.totalorder %s281, 31
        %s283 = scalar_select %p282, %s281, 31
        %s284 = smul.addr %s283, 8
        %s285 = scalar_lea.vmem %s0, %s284
        %s286 = smul.u32 16, %s15
      $region52: #{generator_forward_pallas.1} parent=47 // pred_fallthru
        _
    $region48: #{generator_forward_pallas.1} parent=5 // pred_fallthru
      _
    %p287 = scmp.le.s32.totalorder 1, %s15
    %p288 = scmp.lt.s32.totalorder %s15, 3
    %p289 = pnand %p287, %p288
    %p290 = pneg %p289
    // Predicated region
    $region53: #{generator_forward_pallas.1} parent=5 // pred_check
      _
    $region54: #{generator_forward_pallas.1} parent=5 // pred_check_branch
      %292 = sbr.rel (%p289) target = $region56
    $region55: #{generator_forward_pallas.1} parent=5 // pred_region
      %s293 = ssub.s32 %s15, 1
      %s294 = smul.u32 16, %s20
      %p295 = scmp.lt.s32.totalorder %s294, 31
      %s296 = scalar_select %p295, %s294, 31
      %s297 = smul.addr %s296, 8
      %s298 = scalar_lea.vmem %s0, %s297
      %p299 = pneg %p41
      %p300 = pneg %p38
      %p301 = pneg %p62
      %p302 = pneg %p59
      %p303 = pneg %p83
      %p304 = pneg %p80
      %p305 = pneg %p104
      %p306 = pneg %p101
      %p307 = pneg %p125
      %p308 = pneg %p122
      %p309 = pneg %p146
      %p310 = pneg %p143
      %p311 = pneg %p167
      %p312 = pneg %p164
      %p313 = pneg %p188
      %p314 = pneg %p185
      %p315 = pneg %p209
      %p316 = pneg %p206
      %p317 = pneg %p235
      %p318 = pneg %p232
      %s319 = smul.u32 16, %s20
      %p320 = scmp.lt.s32.totalorder %s319, 31
      %s321 = scalar_select %p320, %s319, 31
      %s322 = smul.addr %s321, 8
      %s323 = scalar_lea.vmem %s9, %s322
      %s324 = smul.u32 16, %s20
      %p325 = scmp.lt.s32.totalorder %s324, 31
      %s326 = scalar_select %p325, %s324, 31
      %s327 = smul.addr %s326, 8
      %s328 = scalar_lea.vmem %s0, %s327
      %s329 = smul.u32 16, %s20
      %s330 = smul.u32 16, %s20
      %p331 = scmp.lt.s32.totalorder %s330, 31
      %s332 = scalar_select %p331, %s330, 31
      %s333 = smul.addr %s332, 8
      %s334 = scalar_lea.vmem %s9, %s333
      %s335 = smul.u32 16, %s20
      %v336 = vld [vmem:[%s328] sm:$0xff]
      %v337 = vld [vmem:[%s328 + $0x8] sm:$0xff]
      %v338 = vld [vmem:[%s328 + $0x10] sm:$0xff]
      %v339 = vld [vmem:[%s328 + $0x18] sm:$0xff]
      %v340 = vld [vmem:[%s328 + $0x20] sm:$0xff]
      %v341 = vld [vmem:[%s328 + $0x28] sm:$0xff]
      %v342 = vld [vmem:[%s328 + $0x30] sm:$0xff]
      %v343 = vld [vmem:[%s328 + $0x38] sm:$0xff]
      %v344 = vld [vmem:[%s328 + $0x40] sm:$0xff]
      %v345 = vld [vmem:[%s328 + $0x48] sm:$0xff]
      %v346 = vld [vmem:[%s328 + $0x50] sm:$0xff]
      %v347 = vld [vmem:[%s328 + $0x58] sm:$0xff]
      %v348 = vld [vmem:[%s328 + $0x60] sm:$0xff]
      %v349 = vld [vmem:[%s328 + $0x68] sm:$0xff]
      %v350 = vld [vmem:[%s328 + $0x70] sm:$0xff]
      %v351 = vld [vmem:[%s328 + $0x78] sm:$0xff]
      %v352 = vld [vmem:[%s1] sm:$0xff]
      %v353 = vld [vmem:[%s1 + $0x8] sm:$0xff]
      %v354 = vld [vmem:[%s1 + $0x10] sm:$0xff]
      %v355 = vld [vmem:[%s1 + $0x18] sm:$0xff]
      %v356 = vld [vmem:[%s1 + $0x20] sm:$0xff]
      %v357 = vld [vmem:[%s1 + $0x28] sm:$0xff]
      %v358 = vld [vmem:[%s1 + $0x30] sm:$0xff]
      %v359 = vld [vmem:[%s1 + $0x38] sm:$0xff]
      %v360 = vld [vmem:[%s1 + $0x40] sm:$0xff]
      %v361 = vld [vmem:[%s1 + $0x48] sm:$0xff]
      %v362 = vld [vmem:[%s1 + $0x50] sm:$0xff]
      %v363 = vld [vmem:[%s1 + $0x58] sm:$0xff]
      %v364 = vld [vmem:[%s1 + $0x60] sm:$0xff]
      %v365 = vld [vmem:[%s1 + $0x68] sm:$0xff]
      %v366 = vld [vmem:[%s1 + $0x70] sm:$0xff]
      %v367 = vld [vmem:[%s1 + $0x78] sm:$0xff]
      %v368 = vld [vmem:[%s2] sm:$0x1]
      %v370 = vlaneseq
      %v371 = vshrl.u32 %v370, 7
      %v372 = vsub.s32 0, %v371
      %v373 = vrot.slane %v368, %v372
      %375 = vmatprep.subr.mxu0 0.0
      %376 = vmatpush1.msra.mxu0 %v352
      %377 = vmatprep.subr.mxu0 0.0
      %378 = vmatpush1.msra.mxu0 %v353
      %379 = vmatprep.subr.mxu0 0.0
      %380 = vmatpush1.msra.mxu0 %v354
      %381 = vmatprep.subr.mxu0 0.0
      %382 = vmatpush1.msra.mxu0 %v355
      %383 = vmatprep.subr.mxu0 0.0
      %384 = vmatpush1.msra.mxu0 %v356
      %385 = vmatprep.subr.mxu0 0.0
      %386 = vmatpush1.msra.mxu0 %v357
      %387 = vmatprep.subr.mxu0 0.0
      %388 = vmatpush1.msra.mxu0 %v358
      %389 = vmatprep.subr.mxu0 0.0
      %390 = vmatpush1.msra.mxu0 %v359
      %391 = vmatprep.subr.mxu0 0.0
      %392 = vmatpush1.msra.mxu0 %v360
      %393 = vmatprep.subr.mxu0 0.0
      %394 = vmatpush1.msra.mxu0 %v361
      %395 = vmatprep.subr.mxu0 0.0
      %396 = vmatpush1.msra.mxu0 %v362
      %397 = vmatprep.subr.mxu0 0.0
      %398 = vmatpush1.msra.mxu0 %v363
      %399 = vmatprep.subr.mxu0 0.0
      %400 = vmatpush1.msra.mxu0 %v364
      %401 = vmatprep.subr.mxu0 0.0
      %402 = vmatpush1.msra.mxu0 %v365
      %403 = vmatprep.subr.mxu0 0.0
      %404 = vmatpush1.msra.mxu0 %v366
      %405 = vmatprep.subr.mxu0 0.0
      %406 = vmatpush1.msra.mxu0 %v367
      %407 = vmatprep.subr.mxu0 0.0
      %408 = vmatpush1.msra.mxu0 0.0
      %409 = vmatprep.subr.mxu0 0.0
      %410 = vmatpush1.msra.mxu0 0.0
      %411 = vmatprep.subr.mxu0 0.0
      %412 = vmatpush1.msra.mxu0 0.0
      %413 = vmatprep.subr.mxu0 0.0
      %414 = vmatpush1.msra.mxu0 0.0
      %415 = vmatprep.subr.mxu0 0.0
      %416 = vmatpush1.msra.mxu0 0.0
      %417 = vmatprep.subr.mxu0 0.0
      %418 = vmatpush1.msra.mxu0 0.0
      %419 = vmatprep.subr.mxu0 0.0
      %420 = vmatpush1.msra.mxu0 0.0
      %421 = vmatprep.subr.mxu0 0.0
      %422 = vmatpush1.msra.mxu0 0.0
      %423 = vmatprep.subr.mxu0 0.0
      %424 = vmatpush1.msra.mxu0 0.0
      %425 = vmatprep.subr.mxu0 0.0
      %426 = vmatpush1.msra.mxu0 0.0
      %427 = vmatprep.subr.mxu0 0.0
      %428 = vmatpush1.msra.mxu0 0.0
      %429 = vmatprep.subr.mxu0 0.0
      %430 = vmatpush1.msra.mxu0 0.0
      %431 = vmatprep.subr.mxu0 0.0
      %432 = vmatpush1.msra.mxu0 0.0
      %433 = vmatprep.subr.mxu0 0.0
      %434 = vmatpush1.msra.mxu0 0.0
      %435 = vmatprep.subr.mxu0 0.0
      %436 = vmatpush1.msra.mxu0 0.0
      %437 = vmatprep.subr.mxu0 0.0
      %438 = vmatpush1.msra.mxu0 0.0
      %439 = vmatprep.mubr.f32.mxu0 0.0
      %440 = vmatmul.mubr.f32.gmra.mrb[0].mxu0 %v336
      %v441 = vpop.f32.mrb[0].mxu0
      %v442 = vadd.f32 %v373, %v441
      %v443 = vpop.f32.mrb[0].mxu0
      %444 = vmatprep.mubr.f32.mxu0 0.0
      %445 = vmatmul.mubr.f32.gmra.mrb[0].mxu0 %v337
      %v446 = vpop.f32.mrb[0].mxu0
      %v447 = vadd.f32 %v373, %v446
      %v448 = vpop.f32.mrb[0].mxu0
      %449 = vmatprep.mubr.f32.mxu0 0.0
      %450 = vmatmul.mubr.f32.gmra.mrb[0].mxu0 %v338
      %v451 = vpop.f32.mrb[0].mxu0
      %v452 = vadd.f32 %v373, %v451
      %v453 = vpop.f32.mrb[0].mxu0
      %454 = vmatprep.mubr.f32.mxu0 0.0
      %455 = vmatmul.mubr.f32.gmra.mrb[0].mxu0 %v339
      %v456 = vpop.f32.mrb[0].mxu0
      %v457 = vadd.f32 %v373, %v456
      %v458 = vpop.f32.mrb[0].mxu0
      %459 = vmatprep.mubr.f32.mxu0 0.0
      %460 = vmatmul.mubr.f32.gmra.mrb[0].mxu0 %v340
      %v461 = vpop.f32.mrb[0].mxu0
      %v462 = vadd.f32 %v373, %v461
      %v463 = vpop.f32.mrb[0].mxu0
      %464 = vmatprep.mubr.f32.mxu0 0.0
      %465 = vmatmul.mubr.f32.gmra.mrb[0].mxu0 %v341
      %v466 = vpop.f32.mrb[0].mxu0
      %v467 = vadd.f32 %v373, %v466
      %v468 = vpop.f32.mrb[0].mxu0
      %469 = vmatprep.mubr.f32.mxu0 0.0
      %470 = vmatmul.mubr.f32.gmra.mrb[0].mxu0 %v342
      %v471 = vpop.f32.mrb[0].mxu0
      %v472 = vadd.f32 %v373, %v471
      %v473 = vpop.f32.mrb[0].mxu0
      %474 = vmatprep.mubr.f32.mxu0 0.0
      %475 = vmatmul.mubr.f32.gmra.mrb[0].mxu0 %v343
      %v476 = vpop.f32.mrb[0].mxu0
      %v477 = vadd.f32 %v373, %v476
      %v478 = vpop.f32.mrb[0].mxu0
      %479 = vmatprep.mubr.f32.mxu0 0.0
      %480 = vmatmul.mubr.f32.gmra.mrb[0].mxu0 %v344
      %v481 = vpop.f32.mrb[0].mxu0
      %v482 = vadd.f32 %v373, %v481
      %v483 = vpop.f32.mrb[0].mxu0
      %484 = vmatprep.mubr.f32.mxu0 0.0
      %485 = vmatmul.mubr.f32.gmra.mrb[0].mxu0 %v345
      %v486 = vpop.f32.mrb[0].mxu0
      %v487 = vadd.f32 %v373, %v486
      %v488 = vpop.f32.mrb[0].mxu0
      %489 = vmatprep.mubr.f32.mxu0 0.0
      %490 = vmatmul.mubr.f32.gmra.mrb[0].mxu0 %v346
      %v491 = vpop.f32.mrb[0].mxu0
      %v492 = vadd.f32 %v373, %v491
      %v493 = vpop.f32.mrb[0].mxu0
      %494 = vmatprep.mubr.f32.mxu0 0.0
      %495 = vmatmul.mubr.f32.gmra.mrb[0].mxu0 %v347
      %v496 = vpop.f32.mrb[0].mxu0
      %v497 = vadd.f32 %v373, %v496
      %v498 = vpop.f32.mrb[0].mxu0
      %499 = vmatprep.mubr.f32.mxu0 0.0
      %500 = vmatmul.mubr.f32.gmra.mrb[0].mxu0 %v348
      %v501 = vpop.f32.mrb[0].mxu0
      %v502 = vadd.f32 %v373, %v501
      %v503 = vpop.f32.mrb[0].mxu0
      %504 = vmatprep.mubr.f32.mxu0 0.0
      %505 = vmatmul.mubr.f32.gmra.mrb[0].mxu0 %v349
      %v506 = vpop.f32.mrb[0].mxu0
      %v507 = vadd.f32 %v373, %v506
      %v508 = vpop.f32.mrb[0].mxu0
      %509 = vmatprep.mubr.f32.mxu0 0.0
      %510 = vmatmul.mubr.f32.gmra.mrb[0].mxu0 %v350
      %v511 = vpop.f32.mrb[0].mxu0
      %v512 = vadd.f32 %v373, %v511
      %v513 = vpop.f32.mrb[0].mxu0
      %514 = vmatprep.mubr.f32.mxu0 0.0
      %515 = vmatmul.mubr.f32.gmra.mrb[0].mxu0 %v351
      %v516 = vpop.f32.mrb[0].mxu0
      %v517 = vadd.f32 %v373, %v516
      %v518 = vpop.f32.mrb[0].mxu0
      %519 = vdwg.mxu0
      %v520 = vmax.f32 %v442, 0.0
      %v521 = vmax.f32 %v447, 0.0
      %v522 = vmax.f32 %v452, 0.0
      %v523 = vmax.f32 %v457, 0.0
      %v524 = vmax.f32 %v462, 0.0
      %v525 = vmax.f32 %v467, 0.0
      %v526 = vmax.f32 %v472, 0.0
      %v527 = vmax.f32 %v477, 0.0
      %v528 = vmax.f32 %v482, 0.0
      %v529 = vmax.f32 %v487, 0.0
      %v530 = vmax.f32 %v492, 0.0
      %v531 = vmax.f32 %v497, 0.0
      %v532 = vmax.f32 %v502, 0.0
      %v533 = vmax.f32 %v507, 0.0
      %v534 = vmax.f32 %v512, 0.0
      %v535 = vmax.f32 %v517, 0.0
      %v536 = vld [vmem:[%s3] sm:$0xff]
      %v537 = vld [vmem:[%s3 + $0x8] sm:$0xff]
      %v538 = vld [vmem:[%s3 + $0x10] sm:$0xff]
      %v539 = vld [vmem:[%s3 + $0x18] sm:$0xff]
      %v540 = vld [vmem:[%s3 + $0x20] sm:$0xff]
      %v541 = vld [vmem:[%s3 + $0x28] sm:$0xff]
      %v542 = vld [vmem:[%s3 + $0x30] sm:$0xff]
      %v543 = vld [vmem:[%s3 + $0x38] sm:$0xff]
      %v544 = vld [vmem:[%s3 + $0x40] sm:$0xff]
      %v545 = vld [vmem:[%s3 + $0x48] sm:$0xff]
      %v546 = vld [vmem:[%s3 + $0x50] sm:$0xff]
      %v547 = vld [vmem:[%s3 + $0x58] sm:$0xff]
      %v548 = vld [vmem:[%s3 + $0x60] sm:$0xff]
      %v549 = vld [vmem:[%s3 + $0x68] sm:$0xff]
      %v550 = vld [vmem:[%s3 + $0x70] sm:$0xff]
      %v551 = vld [vmem:[%s3 + $0x78] sm:$0xff]
      %v552 = vld [vmem:[%s4] sm:$0x1]
      %v554 = vlaneseq
      %v555 = vshrl.u32 %v554, 7
      %v556 = vsub.s32 0, %v555
      %v557 = vrot.slane %v552, %v556
      %559 = vmatprep.subr.mxu0 0.0
      %560 = vmatpush1.msra.mxu0 %v536
      %561 = vmatprep.subr.mxu0 0.0
      %562 = vmatpush1.msra.mxu0 %v537
      %563 = vmatprep.subr.mxu0 0.0
      %564 = vmatpush1.msra.mxu0 %v538
      %565 = vmatprep.subr.mxu0 0.0
      %566 = vmatpush1.msra.mxu0 %v539
      %567 = vmatprep.subr.mxu0 0.0
      %568 = vmatpush1.msra.mxu0 %v540
      %569 = vmatprep.subr.mxu0 0.0
      %570 = vmatpush1.msra.mxu0 %v541
      %571 = vmatprep.subr.mxu0 0.0
      %572 = vmatpush1.msra.mxu0 %v542
      %573 = vmatprep.subr.mxu0 0.0
      %574 = vmatpush1.msra.mxu0 %v543
      %575 = vmatprep.subr.mxu0 0.0
      %576 = vmatpush1.msra.mxu0 %v544
      %577 = vmatprep.subr.mxu0 0.0
      %578 = vmatpush1.msra.mxu0 %v545
      %579 = vmatprep.subr.mxu0 0.0
      %580 = vmatpush1.msra.mxu0 %v546
      %581 = vmatprep.subr.mxu0 0.0
      %582 = vmatpush1.msra.mxu0 %v547
      %583 = vmatprep.subr.mxu0 0.0
      %584 = vmatpush1.msra.mxu0 %v548
      %585 = vmatprep.subr.mxu0 0.0
      %586 = vmatpush1.msra.mxu0 %v549
      %587 = vmatprep.subr.mxu0 0.0
      %588 = vmatpush1.msra.mxu0 %v550
      %589 = vmatprep.subr.mxu0 0.0
      %590 = vmatpush1.msra.mxu0 %v551
      %591 = vmatprep.subr.mxu0 0.0
      %592 = vmatpush1.msra.mxu0 0.0
      %593 = vmatprep.subr.mxu0 0.0
      %594 = vmatpush1.msra.mxu0 0.0
      %595 = vmatprep.subr.mxu0 0.0
      %596 = vmatpush1.msra.mxu0 0.0
      %597 = vmatprep.subr.mxu0 0.0
      %598 = vmatpush1.msra.mxu0 0.0
      %599 = vmatprep.subr.mxu0 0.0
      %600 = vmatpush1.msra.mxu0 0.0
      %601 = vmatprep.subr.mxu0 0.0
      %602 = vmatpush1.msra.mxu0 0.0
      %603 = vmatprep.subr.mxu0 0.0
      %604 = vmatpush1.msra.mxu0 0.0
      %605 = vmatprep.subr.mxu0 0.0
      %606 = vmatpush1.msra.mxu0 0.0
      %607 = vmatprep.subr.mxu0 0.0
      %608 = vmatpush1.msra.mxu0 0.0
      %609 = vmatprep.subr.mxu0 0.0
      %610 = vmatpush1.msra.mxu0 0.0
      %611 = vmatprep.subr.mxu0 0.0
      %612 = vmatpush1.msra.mxu0 0.0
      %613 = vmatprep.subr.mxu0 0.0
      %614 = vmatpush1.msra.mxu0 0.0
      %615 = vmatprep.subr.mxu0 0.0
      %616 = vmatpush1.msra.mxu0 0.0
      %617 = vmatprep.subr.mxu0 0.0
      %618 = vmatpush1.msra.mxu0 0.0
      %619 = vmatprep.subr.mxu0 0.0
      %620 = vmatpush1.msra.mxu0 0.0
      %621 = vmatprep.subr.mxu0 0.0
      %622 = vmatpush1.msra.mxu0 0.0
      %623 = vmatprep.mubr.f32.mxu0 0.0
      %624 = vmatmul.mubr.f32.gmra.mrb[0].mxu0 %v520
      %v625 = vpop.f32.mrb[0].mxu0
      %v626 = vadd.f32 %v557, %v625
      %v627 = vpop.f32.mrb[0].mxu0
      %628 = vmatprep.mubr.f32.mxu0 0.0
      %629 = vmatmul.mubr.f32.gmra.mrb[0].mxu0 %v521
      %v630 = vpop.f32.mrb[0].mxu0
      %v631 = vadd.f32 %v557, %v630
      %v632 = vpop.f32.mrb[0].mxu0
      %633 = vmatprep.mubr.f32.mxu0 0.0
      %634 = vmatmul.mubr.f32.gmra.mrb[0].mxu0 %v522
      %v635 = vpop.f32.mrb[0].mxu0
      %v636 = vadd.f32 %v557, %v635
      %v637 = vpop.f32.mrb[0].mxu0
      %638 = vmatprep.mubr.f32.mxu0 0.0
      %639 = vmatmul.mubr.f32.gmra.mrb[0].mxu0 %v523
      %v640 = vpop.f32.mrb[0].mxu0
      %v641 = vadd.f32 %v557, %v640
      %v642 = vpop.f32.mrb[0].mxu0
      %643 = vmatprep.mubr.f32.mxu0 0.0
      %644 = vmatmul.mubr.f32.gmra.mrb[0].mxu0 %v524
      %v645 = vpop.f32.mrb[0].mxu0
      %v646 = vadd.f32 %v557, %v645
      %v647 = vpop.f32.mrb[0].mxu0
      %648 = vmatprep.mubr.f32.mxu0 0.0
      %649 = vmatmul.mubr.f32.gmra.mrb[0].mxu0 %v525
      %v650 = vpop.f32.mrb[0].mxu0
      %v651 = vadd.f32 %v557, %v650
      %v652 = vpop.f32.mrb[0].mxu0
      %653 = vmatprep.mubr.f32.mxu0 0.0
      %654 = vmatmul.mubr.f32.gmra.mrb[0].mxu0 %v526
      %v655 = vpop.f32.mrb[0].mxu0
      %v656 = vadd.f32 %v557, %v655
      %v657 = vpop.f32.mrb[0].mxu0
      %658 = vmatprep.mubr.f32.mxu0 0.0
      %659 = vmatmul.mubr.f32.gmra.mrb[0].mxu0 %v527
      %v660 = vpop.f32.mrb[0].mxu0
      %v661 = vadd.f32 %v557, %v660
      %v662 = vpop.f32.mrb[0].mxu0
      %663 = vmatprep.mubr.f32.mxu0 0.0
      %664 = vmatmul.mubr.f32.gmra.mrb[0].mxu0 %v528
      %v665 = vpop.f32.mrb[0].mxu0
      %v666 = vadd.f32 %v557, %v665
      %v667 = vpop.f32.mrb[0].mxu0
      %668 = vmatprep.mubr.f32.mxu0 0.0
      %669 = vmatmul.mubr.f32.gmra.mrb[0].mxu0 %v529
      %v670 = vpop.f32.mrb[0].mxu0
      %v671 = vadd.f32 %v557, %v670
      %v672 = vpop.f32.mrb[0].mxu0
      %673 = vmatprep.mubr.f32.mxu0 0.0
      %674 = vmatmul.mubr.f32.gmra.mrb[0].mxu0 %v530
      %v675 = vpop.f32.mrb[0].mxu0
      %v676 = vadd.f32 %v557, %v675
      %v677 = vpop.f32.mrb[0].mxu0
      %678 = vmatprep.mubr.f32.mxu0 0.0
      %679 = vmatmul.mubr.f32.gmra.mrb[0].mxu0 %v531
      %v680 = vpop.f32.mrb[0].mxu0
      %v681 = vadd.f32 %v557, %v680
      %v682 = vpop.f32.mrb[0].mxu0
      %683 = vmatprep.mubr.f32.mxu0 0.0
      %684 = vmatmul.mubr.f32.gmra.mrb[0].mxu0 %v532
      %v685 = vpop.f32.mrb[0].mxu0
      %v686 = vadd.f32 %v557, %v685
      %v687 = vpop.f32.mrb[0].mxu0
      %688 = vmatprep.mubr.f32.mxu0 0.0
      %689 = vmatmul.mubr.f32.gmra.mrb[0].mxu0 %v533
      %v690 = vpop.f32.mrb[0].mxu0
      %v691 = vadd.f32 %v557, %v690
      %v692 = vpop.f32.mrb[0].mxu0
      %693 = vmatprep.mubr.f32.mxu0 0.0
      %694 = vmatmul.mubr.f32.gmra.mrb[0].mxu0 %v534
      %v695 = vpop.f32.mrb[0].mxu0
      %v696 = vadd.f32 %v557, %v695
      %v697 = vpop.f32.mrb[0].mxu0
      %698 = vmatprep.mubr.f32.mxu0 0.0
      %699 = vmatmul.mubr.f32.gmra.mrb[0].mxu0 %v535
      %v700 = vpop.f32.mrb[0].mxu0
      %v701 = vadd.f32 %v557, %v700
      %v702 = vpop.f32.mrb[0].mxu0
      %703 = vdwg.mxu0
      %v704 = vmax.f32 %v626, 0.0
      %v705 = vmax.f32 %v631, 0.0
      %v706 = vmax.f32 %v636, 0.0
      %v707 = vmax.f32 %v641, 0.0
      %v708 = vmax.f32 %v646, 0.0
      %v709 = vmax.f32 %v651, 0.0
      %v710 = vmax.f32 %v656, 0.0
      %v711 = vmax.f32 %v661, 0.0
      %v712 = vmax.f32 %v666, 0.0
      %v713 = vmax.f32 %v671, 0.0
      %v714 = vmax.f32 %v676, 0.0
      %v715 = vmax.f32 %v681, 0.0
      %v716 = vmax.f32 %v686, 0.0
      %v717 = vmax.f32 %v691, 0.0
      %v718 = vmax.f32 %v696, 0.0
      %v719 = vmax.f32 %v701, 0.0
      %v720 = vld [vmem:[%s5] sm:$0xff]
      %v721 = vld [vmem:[%s5 + $0x8] sm:$0xff]
      %v722 = vld [vmem:[%s5 + $0x10] sm:$0xff]
      %v723 = vld [vmem:[%s5 + $0x18] sm:$0xff]
      %v724 = vld [vmem:[%s5 + $0x20] sm:$0xff]
      %v725 = vld [vmem:[%s5 + $0x28] sm:$0xff]
      %v726 = vld [vmem:[%s5 + $0x30] sm:$0xff]
      %v727 = vld [vmem:[%s5 + $0x38] sm:$0xff]
      %v728 = vld [vmem:[%s5 + $0x40] sm:$0xff]
      %v729 = vld [vmem:[%s5 + $0x48] sm:$0xff]
      %v730 = vld [vmem:[%s5 + $0x50] sm:$0xff]
      %v731 = vld [vmem:[%s5 + $0x58] sm:$0xff]
      %v732 = vld [vmem:[%s5 + $0x60] sm:$0xff]
      %v733 = vld [vmem:[%s5 + $0x68] sm:$0xff]
      %v734 = vld [vmem:[%s5 + $0x70] sm:$0xff]
      %v735 = vld [vmem:[%s5 + $0x78] sm:$0xff]
      %v736 = vld [vmem:[%s6] sm:$0x1]
      %v738 = vlaneseq
      %v739 = vshrl.u32 %v738, 7
      %v740 = vsub.s32 0, %v739
      %v741 = vrot.slane %v736, %v740
      %743 = vmatprep.subr.mxu0 0.0
      %744 = vmatpush1.msra.mxu0 %v720
      %745 = vmatprep.subr.mxu0 0.0
      %746 = vmatpush1.msra.mxu0 %v721
      %747 = vmatprep.subr.mxu0 0.0
      %748 = vmatpush1.msra.mxu0 %v722
      %749 = vmatprep.subr.mxu0 0.0
      %750 = vmatpush1.msra.mxu0 %v723
      %751 = vmatprep.subr.mxu0 0.0
      %752 = vmatpush1.msra.mxu0 %v724
      %753 = vmatprep.subr.mxu0 0.0
      %754 = vmatpush1.msra.mxu0 %v725
      %755 = vmatprep.subr.mxu0 0.0
      %756 = vmatpush1.msra.mxu0 %v726
      %757 = vmatprep.subr.mxu0 0.0
      %758 = vmatpush1.msra.mxu0 %v727
      %759 = vmatprep.subr.mxu0 0.0
      %760 = vmatpush1.msra.mxu0 %v728
      %761 = vmatprep.subr.mxu0 0.0
      %762 = vmatpush1.msra.mxu0 %v729
      %763 = vmatprep.subr.mxu0 0.0
      %764 = vmatpush1.msra.mxu0 %v730
      %765 = vmatprep.subr.mxu0 0.0
      %766 = vmatpush1.msra.mxu0 %v731
      %767 = vmatprep.subr.mxu0 0.0
      %768 = vmatpush1.msra.mxu0 %v732
      %769 = vmatprep.subr.mxu0 0.0
      %770 = vmatpush1.msra.mxu0 %v733
      %771 = vmatprep.subr.mxu0 0.0
      %772 = vmatpush1.msra.mxu0 %v734
      %773 = vmatprep.subr.mxu0 0.0
      %774 = vmatpush1.msra.mxu0 %v735
      %775 = vmatprep.subr.mxu0 0.0
      %776 = vmatpush1.msra.mxu0 0.0
      %777 = vmatprep.subr.mxu0 0.0
      %778 = vmatpush1.msra.mxu0 0.0
      %779 = vmatprep.subr.mxu0 0.0
      %780 = vmatpush1.msra.mxu0 0.0
      %781 = vmatprep.subr.mxu0 0.0
      %782 = vmatpush1.msra.mxu0 0.0
      %783 = vmatprep.subr.mxu0 0.0
      %784 = vmatpush1.msra.mxu0 0.0
      %785 = vmatprep.subr.mxu0 0.0
      %786 = vmatpush1.msra.mxu0 0.0
      %787 = vmatprep.subr.mxu0 0.0
      %788 = vmatpush1.msra.mxu0 0.0
      %789 = vmatprep.subr.mxu0 0.0
      %790 = vmatpush1.msra.mxu0 0.0
      %791 = vmatprep.subr.mxu0 0.0
      %792 = vmatpush1.msra.mxu0 0.0
      %793 = vmatprep.subr.mxu0 0.0
      %794 = vmatpush1.msra.mxu0 0.0
      %795 = vmatprep.subr.mxu0 0.0
      %796 = vmatpush1.msra.mxu0 0.0
      %797 = vmatprep.subr.mxu0 0.0
      %798 = vmatpush1.msra.mxu0 0.0
      %799 = vmatprep.subr.mxu0 0.0
      %800 = vmatpush1.msra.mxu0 0.0
      %801 = vmatprep.subr.mxu0 0.0
      %802 = vmatpush1.msra.mxu0 0.0
      %803 = vmatprep.subr.mxu0 0.0
      %804 = vmatpush1.msra.mxu0 0.0
      %805 = vmatprep.subr.mxu0 0.0
      %806 = vmatpush1.msra.mxu0 0.0
      %807 = vmatprep.mubr.f32.mxu0 0.0
      %808 = vmatmul.mubr.f32.gmra.mrb[0].mxu0 %v704
      %v809 = vpop.f32.mrb[0].mxu0
      %v810 = vadd.f32 %v741, %v809
      %v811 = vpop.f32.mrb[0].mxu0
      %812 = vmatprep.mubr.f32.mxu0 0.0
      %813 = vmatmul.mubr.f32.gmra.mrb[0].mxu0 %v705
      %v814 = vpop.f32.mrb[0].mxu0
      %v815 = vadd.f32 %v741, %v814
      %v816 = vpop.f32.mrb[0].mxu0
      %817 = vmatprep.mubr.f32.mxu0 0.0
      %818 = vmatmul.mubr.f32.gmra.mrb[0].mxu0 %v706
      %v819 = vpop.f32.mrb[0].mxu0
      %v820 = vadd.f32 %v741, %v819
      %v821 = vpop.f32.mrb[0].mxu0
      %822 = vmatprep.mubr.f32.mxu0 0.0
      %823 = vmatmul.mubr.f32.gmra.mrb[0].mxu0 %v707
      %v824 = vpop.f32.mrb[0].mxu0
      %v825 = vadd.f32 %v741, %v824
      %v826 = vpop.f32.mrb[0].mxu0
      %827 = vmatprep.mubr.f32.mxu0 0.0
      %828 = vmatmul.mubr.f32.gmra.mrb[0].mxu0 %v708
      %v829 = vpop.f32.mrb[0].mxu0
      %v830 = vadd.f32 %v741, %v829
      %v831 = vpop.f32.mrb[0].mxu0
      %832 = vmatprep.mubr.f32.mxu0 0.0
      %833 = vmatmul.mubr.f32.gmra.mrb[0].mxu0 %v709
      %v834 = vpop.f32.mrb[0].mxu0
      %v835 = vadd.f32 %v741, %v834
      %v836 = vpop.f32.mrb[0].mxu0
      %837 = vmatprep.mubr.f32.mxu0 0.0
      %838 = vmatmul.mubr.f32.gmra.mrb[0].mxu0 %v710
      %v839 = vpop.f32.mrb[0].mxu0
      %v840 = vadd.f32 %v741, %v839
      %v841 = vpop.f32.mrb[0].mxu0
      %842 = vmatprep.mubr.f32.mxu0 0.0
      %843 = vmatmul.mubr.f32.gmra.mrb[0].mxu0 %v711
      %v844 = vpop.f32.mrb[0].mxu0
      %v845 = vadd.f32 %v741, %v844
      %v846 = vpop.f32.mrb[0].mxu0
      %847 = vmatprep.mubr.f32.mxu0 0.0
      %848 = vmatmul.mubr.f32.gmra.mrb[0].mxu0 %v712
      %v849 = vpop.f32.mrb[0].mxu0
      %v850 = vadd.f32 %v741, %v849
      %v851 = vpop.f32.mrb[0].mxu0
      %852 = vmatprep.mubr.f32.mxu0 0.0
      %853 = vmatmul.mubr.f32.gmra.mrb[0].mxu0 %v713
      %v854 = vpop.f32.mrb[0].mxu0
      %v855 = vadd.f32 %v741, %v854
      %v856 = vpop.f32.mrb[0].mxu0
      %857 = vmatprep.mubr.f32.mxu0 0.0
      %858 = vmatmul.mubr.f32.gmra.mrb[0].mxu0 %v714
      %v859 = vpop.f32.mrb[0].mxu0
      %v860 = vadd.f32 %v741, %v859
      %v861 = vpop.f32.mrb[0].mxu0
      %862 = vmatprep.mubr.f32.mxu0 0.0
      %863 = vmatmul.mubr.f32.gmra.mrb[0].mxu0 %v715
      %v864 = vpop.f32.mrb[0].mxu0
      %v865 = vadd.f32 %v741, %v864
      %v866 = vpop.f32.mrb[0].mxu0
      %867 = vmatprep.mubr.f32.mxu0 0.0
      %868 = vmatmul.mubr.f32.gmra.mrb[0].mxu0 %v716
      %v869 = vpop.f32.mrb[0].mxu0
      %v870 = vadd.f32 %v741, %v869
      %v871 = vpop.f32.mrb[0].mxu0
      %872 = vmatprep.mubr.f32.mxu0 0.0
      %873 = vmatmul.mubr.f32.gmra.mrb[0].mxu0 %v717
      %v874 = vpop.f32.mrb[0].mxu0
      %v875 = vadd.f32 %v741, %v874
      %v876 = vpop.f32.mrb[0].mxu0
      %877 = vmatprep.mubr.f32.mxu0 0.0
      %878 = vmatmul.mubr.f32.gmra.mrb[0].mxu0 %v718
      %v879 = vpop.f32.mrb[0].mxu0
      %v880 = vadd.f32 %v741, %v879
      %v881 = vpop.f32.mrb[0].mxu0
      %882 = vmatprep.mubr.f32.mxu0 0.0
      %883 = vmatmul.mubr.f32.gmra.mrb[0].mxu0 %v719
      %v884 = vpop.f32.mrb[0].mxu0
      %v885 = vadd.f32 %v741, %v884
      %v886 = vpop.f32.mrb[0].mxu0
      %887 = vdwg.mxu0
      %v888 = vmax.f32 %v810, 0.0
      %v889 = vmax.f32 %v815, 0.0
      %v890 = vmax.f32 %v820, 0.0
      %v891 = vmax.f32 %v825, 0.0
      %v892 = vmax.f32 %v830, 0.0
      %v893 = vmax.f32 %v835, 0.0
      %v894 = vmax.f32 %v840, 0.0
      %v895 = vmax.f32 %v845, 0.0
      %v896 = vmax.f32 %v850, 0.0
      %v897 = vmax.f32 %v855, 0.0
      %v898 = vmax.f32 %v860, 0.0
      %v899 = vmax.f32 %v865, 0.0
      %v900 = vmax.f32 %v870, 0.0
      %v901 = vmax.f32 %v875, 0.0
      %v902 = vmax.f32 %v880, 0.0
      %v903 = vmax.f32 %v885, 0.0
      %v904 = vld [vmem:[%s7] sm:$0xff]
      %v905 = vld [vmem:[%s7 + $0x8] sm:$0xff]
      %v906 = vld [vmem:[%s7 + $0x10] sm:$0xff]
      %v907 = vld [vmem:[%s7 + $0x18] sm:$0xff]
      %v908 = vld [vmem:[%s7 + $0x20] sm:$0xff]
      %v909 = vld [vmem:[%s7 + $0x28] sm:$0xff]
      %v910 = vld [vmem:[%s7 + $0x30] sm:$0xff]
      %v911 = vld [vmem:[%s7 + $0x38] sm:$0xff]
      %v912 = vld [vmem:[%s7 + $0x40] sm:$0xff]
      %v913 = vld [vmem:[%s7 + $0x48] sm:$0xff]
      %v914 = vld [vmem:[%s7 + $0x50] sm:$0xff]
      %v915 = vld [vmem:[%s7 + $0x58] sm:$0xff]
      %v916 = vld [vmem:[%s7 + $0x60] sm:$0xff]
      %v917 = vld [vmem:[%s7 + $0x68] sm:$0xff]
      %v918 = vld [vmem:[%s7 + $0x70] sm:$0xff]
      %v919 = vld [vmem:[%s7 + $0x78] sm:$0xff]
      %v920 = vld [vmem:[%s8] sm:$0x1]
      %v922 = vlaneseq
      %v923 = vshrl.u32 %v922, 7
      %v924 = vsub.s32 0, %v923
      %v925 = vrot.slane %v920, %v924
      %927 = vmatprep.subr.mxu0 0.0
      %928 = vmatpush1.msra.mxu0 %v904
      %929 = vmatprep.subr.mxu0 0.0
      %930 = vmatpush1.msra.mxu0 %v905
      %931 = vmatprep.subr.mxu0 0.0
      %932 = vmatpush1.msra.mxu0 %v906
      %933 = vmatprep.subr.mxu0 0.0
      %934 = vmatpush1.msra.mxu0 %v907
      %935 = vmatprep.subr.mxu0 0.0
      %936 = vmatpush1.msra.mxu0 %v908
      %937 = vmatprep.subr.mxu0 0.0
      %938 = vmatpush1.msra.mxu0 %v909
      %939 = vmatprep.subr.mxu0 0.0
      %940 = vmatpush1.msra.mxu0 %v910
      %941 = vmatprep.subr.mxu0 0.0
      %942 = vmatpush1.msra.mxu0 %v911
      %943 = vmatprep.subr.mxu0 0.0
      %944 = vmatpush1.msra.mxu0 %v912
      %945 = vmatprep.subr.mxu0 0.0
      %946 = vmatpush1.msra.mxu0 %v913
      %947 = vmatprep.subr.mxu0 0.0
      %948 = vmatpush1.msra.mxu0 %v914
      %949 = vmatprep.subr.mxu0 0.0
      %950 = vmatpush1.msra.mxu0 %v915
      %951 = vmatprep.subr.mxu0 0.0
      %952 = vmatpush1.msra.mxu0 %v916
      %953 = vmatprep.subr.mxu0 0.0
      %954 = vmatpush1.msra.mxu0 %v917
      %955 = vmatprep.subr.mxu0 0.0
      %956 = vmatpush1.msra.mxu0 %v918
      %957 = vmatprep.subr.mxu0 0.0
      %958 = vmatpush1.msra.mxu0 %v919
      %959 = vmatprep.subr.mxu0 0.0
      %960 = vmatpush1.msra.mxu0 0.0
      %961 = vmatprep.subr.mxu0 0.0
      %962 = vmatpush1.msra.mxu0 0.0
      %963 = vmatprep.subr.mxu0 0.0
      %964 = vmatpush1.msra.mxu0 0.0
      %965 = vmatprep.subr.mxu0 0.0
      %966 = vmatpush1.msra.mxu0 0.0
      %967 = vmatprep.subr.mxu0 0.0
      %968 = vmatpush1.msra.mxu0 0.0
      %969 = vmatprep.subr.mxu0 0.0
      %970 = vmatpush1.msra.mxu0 0.0
      %971 = vmatprep.subr.mxu0 0.0
      %972 = vmatpush1.msra.mxu0 0.0
      %973 = vmatprep.subr.mxu0 0.0
      %974 = vmatpush1.msra.mxu0 0.0
      %975 = vmatprep.subr.mxu0 0.0
      %976 = vmatpush1.msra.mxu0 0.0
      %977 = vmatprep.subr.mxu0 0.0
      %978 = vmatpush1.msra.mxu0 0.0
      %979 = vmatprep.subr.mxu0 0.0
      %980 = vmatpush1.msra.mxu0 0.0
      %981 = vmatprep.subr.mxu0 0.0
      %982 = vmatpush1.msra.mxu0 0.0
      %983 = vmatprep.subr.mxu0 0.0
      %984 = vmatpush1.msra.mxu0 0.0
      %985 = vmatprep.subr.mxu0 0.0
      %986 = vmatpush1.msra.mxu0 0.0
      %987 = vmatprep.subr.mxu0 0.0
      %988 = vmatpush1.msra.mxu0 0.0
      %989 = vmatprep.subr.mxu0 0.0
      %990 = vmatpush1.msra.mxu0 0.0
      %991 = vmatprep.mubr.f32.mxu0 0.0
      %992 = vmatmul.mubr.f32.gmra.mrb[0].mxu0 %v888
      %v993 = vpop.f32.mrb[0].mxu0
      %v994 = vadd.f32 %v925, %v993
      %v995 = vpop.f32.mrb[0].mxu0
      %996 = vmatprep.mubr.f32.mxu0 0.0
      %997 = vmatmul.mubr.f32.gmra.mrb[0].mxu0 %v889
      %v998 = vpop.f32.mrb[0].mxu0
      %v999 = vadd.f32 %v925, %v998
      %v1000 = vpop.f32.mrb[0].mxu0
      %1001 = vmatprep.mubr.f32.mxu0 0.0
      %1002 = vmatmul.mubr.f32.gmra.mrb[0].mxu0 %v890
      %v1003 = vpop.f32.mrb[0].mxu0
      %v1004 = vadd.f32 %v925, %v1003
      %v1005 = vpop.f32.mrb[0].mxu0
      %1006 = vmatprep.mubr.f32.mxu0 0.0
      %1007 = vmatmul.mubr.f32.gmra.mrb[0].mxu0 %v891
      %v1008 = vpop.f32.mrb[0].mxu0
      %v1009 = vadd.f32 %v925, %v1008
      %v1010 = vpop.f32.mrb[0].mxu0
      %1011 = vmatprep.mubr.f32.mxu0 0.0
      %1012 = vmatmul.mubr.f32.gmra.mrb[0].mxu0 %v892
      %v1013 = vpop.f32.mrb[0].mxu0
      %v1014 = vadd.f32 %v925, %v1013
      %v1015 = vpop.f32.mrb[0].mxu0
      %1016 = vmatprep.mubr.f32.mxu0 0.0
      %1017 = vmatmul.mubr.f32.gmra.mrb[0].mxu0 %v893
      %v1018 = vpop.f32.mrb[0].mxu0
      %v1019 = vadd.f32 %v925, %v1018
      %v1020 = vpop.f32.mrb[0].mxu0
      %1021 = vmatprep.mubr.f32.mxu0 0.0
      %1022 = vmatmul.mubr.f32.gmra.mrb[0].mxu0 %v894
      %v1023 = vpop.f32.mrb[0].mxu0
      %v1024 = vadd.f32 %v925, %v1023
      %v1025 = vpop.f32.mrb[0].mxu0
      %1026 = vmatprep.mubr.f32.mxu0 0.0
      %1027 = vmatmul.mubr.f32.gmra.mrb[0].mxu0 %v895
      %v1028 = vpop.f32.mrb[0].mxu0
      %v1029 = vadd.f32 %v925, %v1028
      %v1030 = vpop.f32.mrb[0].mxu0
      %1031 = vmatprep.mubr.f32.mxu0 0.0
      %1032 = vmatmul.mubr.f32.gmra.mrb[0].mxu0 %v896
      %v1033 = vpop.f32.mrb[0].mxu0
      %v1034 = vadd.f32 %v925, %v1033
      %v1035 = vpop.f32.mrb[0].mxu0
      %1036 = vmatprep.mubr.f32.mxu0 0.0
      %1037 = vmatmul.mubr.f32.gmra.mrb[0].mxu0 %v897
      %v1038 = vpop.f32.mrb[0].mxu0
      %v1039 = vadd.f32 %v925, %v1038
      %v1040 = vpop.f32.mrb[0].mxu0
      %1041 = vmatprep.mubr.f32.mxu0 0.0
      %1042 = vmatmul.mubr.f32.gmra.mrb[0].mxu0 %v898
      %v1043 = vpop.f32.mrb[0].mxu0
      %v1044 = vadd.f32 %v925, %v1043
      %v1045 = vpop.f32.mrb[0].mxu0
      %1046 = vmatprep.mubr.f32.mxu0 0.0
      %1047 = vmatmul.mubr.f32.gmra.mrb[0].mxu0 %v899
      %v1048 = vpop.f32.mrb[0].mxu0
      %v1049 = vadd.f32 %v925, %v1048
      %v1050 = vpop.f32.mrb[0].mxu0
      %1051 = vmatprep.mubr.f32.mxu0 0.0
      %1052 = vmatmul.mubr.f32.gmra.mrb[0].mxu0 %v900
      %v1053 = vpop.f32.mrb[0].mxu0
      %v1054 = vadd.f32 %v925, %v1053
      %v1055 = vpop.f32.mrb[0].mxu0
      %1056 = vmatprep.mubr.f32.mxu0 0.0
      %1057 = vmatmul.mubr.f32.gmra.mrb[0].mxu0 %v901
      %v1058 = vpop.f32.mrb[0].mxu0
      %v1059 = vadd.f32 %v925, %v1058
      %v1060 = vpop.f32.mrb[0].mxu0
      %1061 = vmatprep.mubr.f32.mxu0 0.0
      %1062 = vmatmul.mubr.f32.gmra.mrb[0].mxu0 %v902
      %v1063 = vpop.f32.mrb[0].mxu0
      %v1064 = vadd.f32 %v925, %v1063
      %v1065 = vpop.f32.mrb[0].mxu0
      %1066 = vmatprep.mubr.f32.mxu0 0.0
      %1067 = vmatmul.mubr.f32.gmra.mrb[0].mxu0 %v903
      %v1068 = vpop.f32.mrb[0].mxu0
      %v1069 = vadd.f32 %v925, %v1068
      %v1070 = vpop.f32.mrb[0].mxu0
      %1071 = vdwg.mxu0
      %1072 = vst [vmem:[%s334] sm:$0xff] %v994
      %1073 = vst [vmem:[%s334 + $0x8] sm:$0xff] %v999
      %1074 = vst [vmem:[%s334 + $0x10] sm:$0xff] %v1004
      %1075 = vst [vmem:[%s334 + $0x18] sm:$0xff] %v1009
      %1076 = vst [vmem:[%s334 + $0x20] sm:$0xff] %v1014
      %1077 = vst [vmem:[%s334 + $0x28] sm:$0xff] %v1019
      %1078 = vst [vmem:[%s334 + $0x30] sm:$0xff] %v1024
      %1079 = vst [vmem:[%s334 + $0x38] sm:$0xff] %v1029
      %1080 = vst [vmem:[%s334 + $0x40] sm:$0xff] %v1034
      %1081 = vst [vmem:[%s334 + $0x48] sm:$0xff] %v1039
      %1082 = vst [vmem:[%s334 + $0x50] sm:$0xff] %v1044
      %1083 = vst [vmem:[%s334 + $0x58] sm:$0xff] %v1049
      %1084 = vst [vmem:[%s334 + $0x60] sm:$0xff] %v1054
      %1085 = vst [vmem:[%s334 + $0x68] sm:$0xff] %v1059
      %1086 = vst [vmem:[%s334 + $0x70] sm:$0xff] %v1064
      %1087 = vst [vmem:[%s334 + $0x78] sm:$0xff] %v1069
      %s1088 = smul.u32 16, %s20
      %p1089 = scmp.lt.s32.totalorder %s1088, 31
      %s1090 = scalar_select %p1089, %s1088, 31
      %s1091 = smul.addr %s1090, 8
      %s1092 = scalar_lea.vmem %s9, %s1091
      // Predicated region
      $region57: #{generator_forward_pallas.1} parent=55 // pred_check
        %p1093 = pneg %p232
      $region58: #{generator_forward_pallas.1} parent=55 // pred_check_branch
        %1095 = sbr.rel (%p1093) target = $region60
      $region59: #{generator_forward_pallas.1} parent=55 // pred_region
        %s1096 = smul.u32 16, %s20
      $region60: #{generator_forward_pallas.1} parent=55 // pred_fallthru
        _
    $region56: #{generator_forward_pallas.1} parent=5 // pred_fallthru
      _
    %p1097 = scmp.le.s32.totalorder 2, %s15
    // Predicated region
    $region61: #{generator_forward_pallas.1} parent=5 // pred_check
      %p1098 = pneg %p1097
    $region62: #{generator_forward_pallas.1} parent=5 // pred_check_branch
      %1100 = sbr.rel (%p1098) target = $region64
    $region63: #{generator_forward_pallas.1} parent=5 // pred_region
      %s1101 = ssub.s32 %s15, 2
      // Predicated region
      $region65: #{generator_forward_pallas.1} parent=63 // pred_check
        %p1102 = pneg %p238
      $region66: #{generator_forward_pallas.1} parent=63 // pred_check_branch
        %1104 = sbr.rel (%p1102) target = $region68
      $region67: #{generator_forward_pallas.1} parent=63 // pred_region
        %s1105 = smul.u32 16, %s21
        %p1106 = scmp.lt.s32.totalorder %s1105, 31
        %s1107 = scalar_select %p1106, %s1105, 31
        %s1108 = smul.addr %s1107, 8
        %s1109 = scalar_lea.vmem %s9, %s1108
      $region68: #{generator_forward_pallas.1} parent=63 // pred_fallthru
        _
    $region64: #{generator_forward_pallas.1} parent=5 // pred_fallthru
      _
  $region6: #{generator_forward_pallas.1} parent=0 // loop_footer
    %s19 = sadd.s32 1, %s15
  $region7: #{generator_forward_pallas.1} parent=0 // loop_footer_branch
    %14 = sbr.rel target = $region3
  $region8: #{generator_forward_pallas.1} parent=0 // loop_exit
    _

</llo_original>
